<compile_context>
chip_gen: v7x
topology: tpu7x:2x2x1
jax: 0.10.0
libtpu: 0.0.40
codegen_flags: <defaults>
</compile_context>

<pallas_src>
import jax
import jax.numpy as jnp
from jax.experimental import pallas as pl
from jax.experimental.pallas import tpu as pltpu


def attention_kernel(emb_ref, w_ref, out_ref):
    emb = emb_ref[...]                          # (GB, N, F) float32
    w = w_ref[...]                              # (F, F)

    # global_context = mean_n(emb) @ W   (algebraically == mean_n(emb @ W))
    emb_mean = jnp.mean(emb, axis=1)                                        # (GB, F)  sublane reduce
    global_ctx = jnp.dot(emb_mean, w, preferred_element_type=jnp.float32)   # (GB, F)  MXU
    tg = jnp.tanh(global_ctx)                                               # (GB, F)  EUP

    # logits = per-graph emb @ tg, as VPU multiply + lane reduction.
    logits = jnp.sum(emb * tg[:, None, :], axis=-1, keepdims=True)          # (GB, N, 1)

    # sigmoid(x) = 0.5 * (tanh(0.5 * x) + 1): one EUP op, no overflow path.
    scores = 0.5 * (jnp.tanh(0.5 * logits) + 1.0)                           # (GB, N, 1)

    # representation = emb^T @ scores, computed lane-dense as a weighted
    # sublane sum; wrapper reshapes (GB, F) -> (GB, F, 1).
    rep = jnp.sum(scores * emb, axis=1)                                     # (GB, F)
    out_ref[...] = rep.astype(out_ref.dtype)


def _pick_chunk(g, n, f, itemsize=4, vmem_budget_bytes=16 << 20):
    """Pick graphs-per-grid-step GB and the padded graph count.

    Budget is conservative (16 MiB double-buffered input) so the same choice
    is safe on v7x's 64 MiB VMEM as well as v5e/v6e's 128 MiB.
    """
    per_graph = n * f * itemsize
    gb_max = max(1, vmem_budget_bytes // (2 * per_graph))
    if g <= gb_max:
        return g, g  # single chunk -> block dims equal full dims, no padding
    gb = max(8, (gb_max // 8) * 8)        # multiple of 8 for the (GB, F) output block
    g_pad = ((g + gb - 1) // gb) * gb
    return gb, g_pad


def attention_module_batched(embeddings, weight_matrix):
    """embeddings: (G, N, F) float32; weight_matrix: (F, F) -> (G, F, 1)."""
    g, n, f = embeddings.shape
    assert weight_matrix.shape == (f, f)

    gb, g_pad = _pick_chunk(g, n, f)
    if g_pad != g:
        embeddings = jnp.pad(embeddings, ((0, g_pad - g), (0, 0), (0, 0)))
    num_chunks = g_pad // gb

    cost = pl.CostEstimate(
        flops=g_pad * (2 * f * f + 4 * n * f),       # mean-matmul + logits + rep
        transcendentals=g_pad * (f + n),             # tanh(ctx) + tanh-sigmoid
        bytes_accessed=(g_pad * n * f + f * f + g_pad * f) * 4,
    )

    out = pl.pallas_call(
        attention_kernel,
        out_shape=jax.ShapeDtypeStruct((g_pad, f), jnp.float32),
        grid=(num_chunks,),
        in_specs=[
            pl.BlockSpec((gb, n, f), lambda i: (i, 0, 0)),
            pl.BlockSpec((f, f), lambda i: (0, 0)),
        ],
        out_specs=pl.BlockSpec((gb, f), lambda i: (i, 0)),
        compiler_params=pltpu.CompilerParams(
            dimension_semantics=("parallel",),
        ),
        cost_estimate=cost,
    )(embeddings, weight_matrix)

    # (G, F) lane-dense slab -> (G, F, 1) to match torch.mm(embedding.t(), scores).
    return out[:g, :, None]


def attention_module(embedding, weight_matrix):
    """Single graph: embedding (N, F), weight_matrix (F, F) -> (F, 1)."""
    return attention_module_batched(embedding[None], weight_matrix)[0]


def reference(embedding, weight_matrix):
    global_context = jnp.mean(embedding @ weight_matrix, axis=0)
    tg = jnp.tanh(global_context)
    scores = jax.nn.sigmoid(embedding @ tg.reshape(-1, 1))
    return embedding.T @ scores


if __name__ == "__main__":
    # args.filters_3 = 32 (feature dim), N = 8 graph nodes, G = 4 graphs batched.
    N, F, G = 8, 32, 4
    key = jax.random.PRNGKey(0)
    k_emb, k_w = jax.random.split(key)

    embeddings = jax.random.normal(k_emb, (G, N, F), dtype=jnp.float32)

    # Xavier-uniform init for weight_matrix (fan_in = fan_out = F), deterministic.
    limit = (6.0 / (F + F)) ** 0.5
    weight_matrix = jax.random.uniform(
        k_w, (F, F), dtype=jnp.float32, minval=-limit, maxval=limit
    )

    # Batched path (one pallas_call; G=4 graphs fit in a single grid step).
    out_batched = jax.block_until_ready(
        attention_module_batched(embeddings, weight_matrix)
    )
    assert out_batched.shape == (G, F, 1)
    for gi in range(G):
        ref = reference(embeddings[gi], weight_matrix)
        assert jnp.allclose(out_batched[gi], ref, atol=1e-4, rtol=1e-4), (
            f"graph {gi}: max abs diff {jnp.max(jnp.abs(out_batched[gi] - ref))}"
        )

    # Single-graph path (matches the torch module signature exactly).
    out_single = jax.block_until_ready(
        attention_module(embeddings[0], weight_matrix)
    )
    ref0 = reference(embeddings[0], weight_matrix)
    assert out_single.shape == (F, 1)
    assert jnp.allclose(out_single, ref0, atol=1e-4, rtol=1e-4), (
        f"max abs diff: {jnp.max(jnp.abs(out_single - ref0))}"
    )

    print("KERNEL_OK")
</pallas_src>

<mosaic_0001>
module attributes {stable_mosaic.version = 11 : i64} {
  func.func @attention_kernel(%arg0: i32, %arg1: memref<4x8x32xf32, #tpu.memory_space<vmem>>, %arg2: memref<32x32xf32, #tpu.memory_space<vmem>>, %arg3: memref<4x32xf32, #tpu.memory_space<vmem>>) attributes {dimension_semantics = [#tpu.dimension_semantics<parallel>], iteration_bounds = array<i64: 1>, scalar_prefetch = 0 : i64, scratch_operands = 0 : i64, tpu.core_type = #tpu.core_type<tc>, window_params = [{transform_indices = @transform_0, window_bounds = array<i64: 4, 8, 32>}, {pipeline_mode = #tpu.pipeline_mode<synchronous>, transform_indices = @transform_1, window_bounds = array<i64: 32, 32>}, {transform_indices = @transform_2, window_bounds = array<i64: 4, 32>}]} {
    %c0 = arith.constant 0 : index
    %c0_0 = arith.constant 0 : index
    %c0_1 = arith.constant 0 : index
    %0 = vector.load %arg1[%c0, %c0_0, %c0_1] : memref<4x8x32xf32, #tpu.memory_space<vmem>>, vector<4x8x32xf32>
    %c0_2 = arith.constant 0 : index
    %c0_3 = arith.constant 0 : index
    %1 = vector.load %arg2[%c0_2, %c0_3] : memref<32x32xf32, #tpu.memory_space<vmem>>, vector<32x32xf32>
    %cst = arith.constant dense<0.000000e+00> : vector<4x32xf32>
    %2 = vector.multi_reduction <add>, %0, %cst [1] : vector<4x8x32xf32> to vector<4x32xf32>
    %cst_4 = arith.constant 8.000000e+00 : f32
    %3 = vector.broadcast %cst_4 : f32 to vector<4x32xf32>
    %4 = arith.divf %2, %3 : vector<4x32xf32>
    %cst_5 = arith.constant dense<0.000000e+00> : vector<4x32xf32>
    %5 = tpu.matmul %4, %1, %cst_5 {dimension_numbers = #tpu.dot_dimension_numbers<[1], [0], [0], [1], [0, 0, 1, 1], [], []>} : vector<4x32xf32>, vector<32x32xf32>, vector<4x32xf32> -> vector<4x32xf32>
    %6 = math.tanh %5 : vector<4x32xf32>
    %7 = vector.shape_cast %6 : vector<4x32xf32> to vector<4x1x32xf32>
    %8 = vector.broadcast %7 : vector<4x1x32xf32> to vector<4x8x32xf32>
    %9 = arith.mulf %0, %8 : vector<4x8x32xf32>
    %cst_6 = arith.constant dense<0.000000e+00> : vector<4x8xf32>
    %10 = vector.multi_reduction <add>, %9, %cst_6 [2] : vector<4x8x32xf32> to vector<4x8xf32>
    %11 = vector.shape_cast %10 : vector<4x8xf32> to vector<4x8x1xf32>
    %cst_7 = arith.constant 5.000000e-01 : f32
    %12 = vector.broadcast %cst_7 : f32 to vector<4x8x1xf32>
    %13 = arith.mulf %12, %11 : vector<4x8x1xf32>
    %14 = math.tanh %13 : vector<4x8x1xf32>
    %cst_8 = arith.constant 1.000000e+00 : f32
    %15 = vector.broadcast %cst_8 : f32 to vector<4x8x1xf32>
    %16 = arith.addf %14, %15 : vector<4x8x1xf32>
    %cst_9 = arith.constant 5.000000e-01 : f32
    %17 = vector.broadcast %cst_9 : f32 to vector<4x8x1xf32>
    %18 = arith.mulf %17, %16 : vector<4x8x1xf32>
    %19 = vector.broadcast %18 : vector<4x8x1xf32> to vector<4x8x32xf32>
    %20 = arith.mulf %19, %0 : vector<4x8x32xf32>
    %cst_10 = arith.constant dense<0.000000e+00> : vector<4x32xf32>
    %21 = vector.multi_reduction <add>, %20, %cst_10 [1] : vector<4x8x32xf32> to vector<4x32xf32>
    %c0_11 = arith.constant 0 : index
    %c0_12 = arith.constant 0 : index
    %22 = vector.load %arg3[%c0_11, %c0_12] : memref<4x32xf32, #tpu.memory_space<vmem>>, vector<4x32xf32>
    tpu.vector_store %arg3[%c0_11, %c0_12], %21 {strides = array<i32>} : memref<4x32xf32, #tpu.memory_space<vmem>>, vector<4x32xf32>,
    return
  }
  func.func @transform_0(%arg0: i32) -> (i32, i32, i32) {
    %c0_i32 = arith.constant 0 : i32
    %c0_i32_0 = arith.constant 0 : i32
    %c0_i32_1 = arith.constant 0 : i32
    return %arg0, %c0_i32, %c0_i32_0 : i32, i32, i32
  }
  func.func @transform_1(%arg0: i32) -> (i32, i32) {
    %c0_i32 = arith.constant 0 : i32
    %c0_i32_0 = arith.constant 0 : i32
    %c0_i32_1 = arith.constant 0 : i32
    return %c0_i32, %c0_i32_0 : i32, i32
  }
  func.func @transform_2(%arg0: i32) -> (i32, i32) {
    %c0_i32 = arith.constant 0 : i32
    %c0_i32_0 = arith.constant 0 : i32
    return %arg0, %c0_i32 : i32, i32
  }
}

</mosaic_0001>

<llo_original>
// kernel: tpu_custom_call.1
$region0: #{tpu_custom_call.1}
  #allocation0 [shape = 'u32[]', space=smem, size = 0x4, offset = 0x4, fixed_abs, tag = 'smem constant byte address 0x4 - core index']
  #allocation1 [shape = 'u32[144,128]{1,0:T(1,128)}', space=vmem, size = 0x12000, scoped, tag = 'internal scratch']
  %s0 = inlined_call_operand.hbm [shape: f32[4,8,32], index: 0, kind: input, shape index: {}]
  %s1 = inlined_call_operand.hbm [shape: f32[32,32], index: 1, kind: input, shape index: {}]
  %s2 = inlined_call_operand.hbm [shape: f32[4,32], index: 2, kind: output, shape index: {}]
  %s3 = sld [smem:[#allocation0]]
  $region26: #{tpu_custom_call.1} parent=0
    _
  %s5 = ssub.s32 1, %s3
  %s6 = scalar_select 0, %s5, %s3
  $region1: #{tpu_custom_call.1} parent=0
    #allocation2 [shape = 'u8[16384]{0}', space=vmem, size = 0x4000, scoped, tag = 'input window, operand 0, single buffered']
    #allocation3 [shape = 's32[1]{0}', space=sflag, size = 0x4, scoped, tag = 'scoped memory for tpu_custom_call.1']
    #allocation4 [shape = 's32[1]{0}', space=sflag, size = 0x4, scoped, tag = 'scoped memory for tpu_custom_call.1']
    #allocation5 [shape = 'u8[16384]{0}', space=vmem, size = 0x4000, scoped, tag = 'input window, operand 1, single buffered']
    #allocation6 [shape = 's32[1]{0}', space=sflag, size = 0x4, scoped, tag = 'scoped memory for tpu_custom_call.1']
    #allocation7 [shape = 'u8[2048]{0}', space=vmem, size = 0x800, scoped, tag = 'output window, operand 0, single buffered']
    %7 = vsyncpa [#allocation3], 0
    %8 = vsyncpa [#allocation6], 0
    %9 = vsyncpa [#allocation4], 0
    // Predicated region
    $region2: #{tpu_custom_call.1} parent=1 // pred_check
      _
    $region3: #{tpu_custom_call.1} parent=1 // pred_check_branch
      %11 = sbr.rel (0) target = $region5
    $region4: #{tpu_custom_call.1} parent=1 // pred_region
      %s13 = ssub.s32 512, 512
      %14 = vsyncadd [#allocation3], %s13
      %s15 = sshll.u32 [#allocation2], 4
      %s16 = int_to_ptr.vmem [resolvable:$true] %s15
      %21 = dma.hbm_to_vmem [thread:$0]  %s0, 512, %s16, [#allocation3], 128, 128, 8
    $region5: #{tpu_custom_call.1} parent=1 // pred_fallthru
      _
    // Predicated region
    $region6: #{tpu_custom_call.1} parent=1 // pred_check
      _
    $region7: #{tpu_custom_call.1} parent=1 // pred_check_branch
      %23 = sbr.rel (0) target = $region9
    $region8: #{tpu_custom_call.1} parent=1 // pred_region
      %s25 = ssub.s32 512, 512
      %26 = vsyncadd [#allocation6], %s25
      %s27 = sshll.u32 [#allocation5], 4
      %s28 = int_to_ptr.vmem [resolvable:$true] %s27
      %33 = dma.hbm_to_vmem [thread:$0]  %s1, 512, %s28, [#allocation6], 128, 128, 8
    $region9: #{tpu_custom_call.1} parent=1 // pred_fallthru
      _
    // Predicated region
    $region10: #{tpu_custom_call.1} parent=1 // pred_check
      _
    $region11: #{tpu_custom_call.1} parent=1 // pred_check_branch
      %35 = sbr.rel (0) target = $region13
    $region12: #{tpu_custom_call.1} parent=1 // pred_region
      %36 = dma.done [#allocation3], 512
    $region13: #{tpu_custom_call.1} parent=1 // pred_fallthru
      _
    // Predicated region
    $region14: #{tpu_custom_call.1} parent=1 // pred_check
      _
    $region15: #{tpu_custom_call.1} parent=1 // pred_check_branch
      %38 = sbr.rel (0) target = $region17
    $region16: #{tpu_custom_call.1} parent=1 // pred_region
      %39 = dma.done [#allocation6], 512
    $region17: #{tpu_custom_call.1} parent=1 // pred_fallthru
      _
    %v40 = vld [vmem:[#allocation2] sm:$0xff]
    %v41 = vld [vmem:[#allocation2 + $0x8] sm:$0xff]
    %v42 = vld [vmem:[#allocation2 + $0x10] sm:$0xff]
    %v43 = vld [vmem:[#allocation2 + $0x18] sm:$0xff]
    %v44 = vld [vmem:[#allocation5] sm:$0xff]
    %v45 = vld [vmem:[#allocation5 + $0x8] sm:$0xff]
    %v46 = vld [vmem:[#allocation5 + $0x10] sm:$0xff]
    %v47 = vld [vmem:[#allocation5 + $0x18] sm:$0xff]
    %vm48 = vcmask 261120
    %v49 = vsel %vm48, %v40, 0.0
    %v50 = vrot.slane %v49, 4
    %v51 = vadd.f32 %v49, %v50
    %v52 = vrot.slane %v51, 2
    %v53 = vadd.f32 %v51, %v52
    %v54 = vrot.slane %v53, 1
    %v55 = vadd.f32 %v53, %v54
    %v56 = vsel %vm48, %v41, 0.0
    %v57 = vrot.slane %v56, 4
    %v58 = vadd.f32 %v56, %v57
    %v59 = vrot.slane %v58, 2
    %v60 = vadd.f32 %v58, %v59
    %v61 = vrot.slane %v60, 1
    %v62 = vadd.f32 %v60, %v61
    %v63 = vsel %vm48, %v42, 0.0
    %v64 = vrot.slane %v63, 4
    %v65 = vadd.f32 %v63, %v64
    %v66 = vrot.slane %v65, 2
    %v67 = vadd.f32 %v65, %v66
    %v68 = vrot.slane %v67, 1
    %v69 = vadd.f32 %v67, %v68
    %v70 = vsel %vm48, %v43, 0.0
    %v71 = vrot.slane %v70, 4
    %v72 = vadd.f32 %v70, %v71
    %v73 = vrot.slane %v72, 2
    %v74 = vadd.f32 %v72, %v73
    %v75 = vrot.slane %v74, 1
    %v76 = vadd.f32 %v74, %v75
    %v77 = vrcp.pop 8.0
    %v78 = vmul.f32 %v55, %v77
    %v79 = vmul.f32 %v62, %v77
    %v80 = vmul.f32 %v69, %v77
    %v81 = vmul.f32 %v76, %v77
    %vm86 = vcmask 1041409
    %v87 = vsel %vm86, %v79, %v78
    %vm88 = vcmask 1042434
    %v89 = vsel %vm88, %v80, %v87
    %vm90 = vcmask 1043459
    %v91 = vsel %vm90, %v81, %v89
    %v92 = vsel %vm48, %v91, 0
    %94 = vmatprep.subr.mxu0 0.0
    %95 = vmatpush1.msra.mxu0 %v44
    %96 = vmatprep.subr.mxu0 0.0
    %97 = vmatpush1.msra.mxu0 %v45
    %98 = vmatprep.subr.mxu0 0.0
    %99 = vmatpush1.msra.mxu0 %v46
    %100 = vmatprep.subr.mxu0 0.0
    %101 = vmatpush1.msra.mxu0 %v47
    %102 = vmatprep.subr.mxu0 0.0
    %103 = vmatpush1.msra.mxu0 0.0
    %104 = vmatprep.subr.mxu0 0.0
    %105 = vmatpush1.msra.mxu0 0.0
    %106 = vmatprep.subr.mxu0 0.0
    %107 = vmatpush1.msra.mxu0 0.0
    %108 = vmatprep.subr.mxu0 0.0
    %109 = vmatpush1.msra.mxu0 0.0
    %110 = vmatprep.subr.mxu0 0.0
    %111 = vmatpush1.msra.mxu0 0.0
    %112 = vmatprep.subr.mxu0 0.0
    %113 = vmatpush1.msra.mxu0 0.0
    %114 = vmatprep.subr.mxu0 0.0
    %115 = vmatpush1.msra.mxu0 0.0
    %116 = vmatprep.subr.mxu0 0.0
    %117 = vmatpush1.msra.mxu0 0.0
    %118 = vmatprep.subr.mxu0 0.0
    %119 = vmatpush1.msra.mxu0 0.0
    %120 = vmatprep.subr.mxu0 0.0
    %121 = vmatpush1.msra.mxu0 0.0
    %122 = vmatprep.subr.mxu0 0.0
    %123 = vmatpush1.msra.mxu0 0.0
    %124 = vmatprep.subr.mxu0 0.0
    %125 = vmatpush1.msra.mxu0 0.0
    %126 = vmatprep.subr.mxu0 0.0
    %127 = vmatpush1.msra.mxu0 0.0
    %128 = vmatprep.subr.mxu0 0.0
    %129 = vmatpush1.msra.mxu0 0.0
    %130 = vmatprep.subr.mxu0 0.0
    %131 = vmatpush1.msra.mxu0 0.0
    %132 = vmatprep.subr.mxu0 0.0
    %133 = vmatpush1.msra.mxu0 0.0
    %134 = vmatprep.subr.mxu0 0.0
    %135 = vmatpush1.msra.mxu0 0.0
    %136 = vmatprep.subr.mxu0 0.0
    %137 = vmatpush1.msra.mxu0 0.0
    %138 = vmatprep.subr.mxu0 0.0
    %139 = vmatpush1.msra.mxu0 0.0
    %140 = vmatprep.subr.mxu0 0.0
    %141 = vmatpush1.msra.mxu0 0.0
    %142 = vmatprep.subr.mxu0 0.0
    %143 = vmatpush1.msra.mxu0 0.0
    %144 = vmatprep.subr.mxu0 0.0
    %145 = vmatpush1.msra.mxu0 0.0
    %146 = vmatprep.subr.mxu0 0.0
    %147 = vmatpush1.msra.mxu0 0.0
    %148 = vmatprep.subr.mxu0 0.0
    %149 = vmatpush1.msra.mxu0 0.0
    %150 = vmatprep.subr.mxu0 0.0
    %151 = vmatpush1.msra.mxu0 0.0
    %152 = vmatprep.subr.mxu0 0.0
    %153 = vmatpush1.msra.mxu0 0.0
    %154 = vmatprep.subr.mxu0 0.0
    %155 = vmatpush1.msra.mxu0 0.0
    %156 = vmatprep.subr.mxu0 0.0
    %157 = vmatpush1.msra.mxu0 0.0
    %158 = vmatprep.mubr.f32.mxu0 0.0
    %159 = vmatmul.mubr.f32.gmra.mrb[0].mxu0 %v92
    %v160 = vpop.f32.mrb[0].mxu0
    %v161 = vadd.f32 0.0, %v160
    %v162 = vpop.f32.mrb[0].mxu0
    %163 = vdwg.mxu0
    %v164 = vtanh.pop %v161
    %v167 = vunpack.c.l.s4 1966171168
    %v168 = vunpack.c.0.s8 %v167
    %v169 = vlaneseq
    %v170 = vshrl.u32 %v169, 7
    %v171 = vsub.s32 %v168, %v170
    %v172 = vrot.slane %v164, %v171
    %v173 = vcombine.high %v172, %v172
    %v175 = vunpack.c.l.s4 1966171168
    %v176 = vunpack.c.0.s8 %v175
    %v177 = vlaneseq
    %v178 = vshrl.u32 %v177, 7
    %v179 = vsub.s32 %v176, %v178
    %v180 = vrot.slane %v172, %v179
    %v182 = vunpack.c.l.s4 1966171168
    %v183 = vunpack.c.0.s8 %v182
    %v184 = vlaneseq
    %v185 = vshrl.u32 %v184, 7
    %v186 = vsub.s32 %v183, %v185
    %v187 = vrot.slane %v173, %v186
    %v188 = vcombine.high %v180, %v180
    %v189 = vcombine.high %v187, %v187
    %v190 = vlaneseq
    %v191 = vshrl.u32 %v190, 7
    %v192 = vsub.s32 0, %v191
    %v193 = vrot.slane %v180, %v192
    %v194 = vlaneseq
    %v195 = vshrl.u32 %v194, 7
    %v196 = vsub.s32 0, %v195
    %v197 = vrot.slane %v187, %v196
    %v198 = vlaneseq
    %v199 = vshrl.u32 %v198, 7
    %v200 = vsub.s32 0, %v199
    %v201 = vrot.slane %v188, %v200
    %v202 = vlaneseq
    %v203 = vshrl.u32 %v202, 7
    %v204 = vsub.s32 0, %v203
    %v205 = vrot.slane %v189, %v204
    %v210 = vmul.f32 %v40, %v193
    %v211 = vmul.f32 %v41, %v197
    %v212 = vmul.f32 %v42, %v201
    %v213 = vmul.f32 %v43, %v205
    %v214 = vsel %vm48, %v210, 0.0
    %215 = vadd.xlane.f32.xlu0 %v214
    %v216 = vpop.xlane.xlu0 %215
    %v217 = vsel %vm48, %v211, 0.0
    %218 = vadd.xlane.f32.xlu0 %v217
    %v219 = vpop.xlane.xlu0 %218
    %v220 = vsel %vm48, %v212, 0.0
    %221 = vadd.xlane.f32.xlu0 %v220
    %v222 = vpop.xlane.xlu0 %221
    %v223 = vsel %vm48, %v213, 0.0
    %224 = vadd.xlane.f32.xlu0 %v223
    %v225 = vpop.xlane.xlu0 %224
    %v226 = vmul.f32 %v216, 0.5
    %v227 = vmul.f32 %v219, 0.5
    %v228 = vmul.f32 %v222, 0.5
    %v229 = vmul.f32 %v225, 0.5
    %v230 = vtanh.pop %v226
    %v231 = vtanh.pop %v227
    %v232 = vtanh.pop %v228
    %v233 = vtanh.pop %v229
    %v234 = vadd.f32 %v230, 1.0
    %v235 = vadd.f32 %v231, 1.0
    %v236 = vadd.f32 %v232, 1.0
    %v237 = vadd.f32 %v233, 1.0
    %v238 = vmul.f32 %v234, 0.5
    %v239 = vmul.f32 %v235, 0.5
    %v240 = vmul.f32 %v236, 0.5
    %v241 = vmul.f32 %v237, 0.5
    %v242 = vmul.f32 %v238, %v40
    %v243 = vmul.f32 %v239, %v41
    %v244 = vmul.f32 %v240, %v42
    %v245 = vmul.f32 %v241, %v43
    %v246 = vsel %vm48, %v242, 0.0
    %v247 = vrot.slane %v246, 4
    %v248 = vadd.f32 %v246, %v247
    %v249 = vrot.slane %v248, 2
    %v250 = vadd.f32 %v248, %v249
    %v251 = vrot.slane %v250, 1
    %v252 = vadd.f32 %v250, %v251
    %v253 = vsel %vm48, %v243, 0.0
    %v254 = vrot.slane %v253, 4
    %v255 = vadd.f32 %v253, %v254
    %v256 = vrot.slane %v255, 2
    %v257 = vadd.f32 %v255, %v256
    %v258 = vrot.slane %v257, 1
    %v259 = vadd.f32 %v257, %v258
    %v260 = vsel %vm48, %v244, 0.0
    %v261 = vrot.slane %v260, 4
    %v262 = vadd.f32 %v260, %v261
    %v263 = vrot.slane %v262, 2
    %v264 = vadd.f32 %v262, %v263
    %v265 = vrot.slane %v264, 1
    %v266 = vadd.f32 %v264, %v265
    %v267 = vsel %vm48, %v245, 0.0
    %v268 = vrot.slane %v267, 4
    %v269 = vadd.f32 %v267, %v268
    %v270 = vrot.slane %v269, 2
    %v271 = vadd.f32 %v269, %v270
    %v272 = vrot.slane %v271, 1
    %v273 = vadd.f32 %v271, %v272
    %v278 = vsel %vm86, %v259, %v252
    %v279 = vsel %vm88, %v266, %v278
    %v280 = vsel %vm90, %v273, %v279
    %vm282 = vcmask 257024
    %283 = vst.msk [vmem:[#allocation7] sm:$0xf] %vm282, %v280
    // Predicated region
    $region18: #{tpu_custom_call.1} parent=1 // pred_check
      _
    $region19: #{tpu_custom_call.1} parent=1 // pred_check_branch
      %285 = sbr.rel (0) target = $region21
    $region20: #{tpu_custom_call.1} parent=1 // pred_region
      %s287 = ssub.s32 64, 64
      %288 = vsyncadd [#allocation4], %s287
      %s290 = sshll.u32 [#allocation7], 4
      %s291 = int_to_ptr.vmem [resolvable:$true] %s290
      %293 = dma.vmem_to_hbm [thread:$0]  %s291, 64, %s2, [#allocation4]
    $region21: #{tpu_custom_call.1} parent=1 // pred_fallthru
      _
    // Predicated region
    $region22: #{tpu_custom_call.1} parent=1 // pred_check
      _
    $region23: #{tpu_custom_call.1} parent=1 // pred_check_branch
      %295 = sbr.rel (0) target = $region25
    $region24: #{tpu_custom_call.1} parent=1 // pred_region
      %296 = dma.done [#allocation4], 64
    $region25: #{tpu_custom_call.1} parent=1 // pred_fallthru
      _
    %297 = vsyncpa [#allocation3], 1
    %298 = vsyncpa [#allocation6], 1
    %299 = vsyncpa [#allocation4], 1

</llo_original>
